<compile_context>
chip_gen: v6e
topology: v6e:2x2x1
jax: 0.10.0
libtpu: 0.0.40
codegen_flags: <defaults>
</compile_context>

<pallas_src>
import functools

import jax
import jax.numpy as jnp
from jax import lax
from jax.experimental import pallas as pl
from jax.experimental.pallas import tpu as pltpu

GAMMA = 1.5
ALPHA = 0.25
LANES = 128


def _round_down(x, m):
    return (x // m) * m


def _focal_loss_kernel(pred_ref, true_ref, out_ref, *, gamma, alpha,
                       approx_reciprocal):
    i = pl.program_id(1)   # tile within shard ("arbitrary" reduction axis)

    @pl.when(i == 0)
    def _():
        out_ref[...] = jnp.zeros_like(out_ref)

    x = pred_ref[...].astype(jnp.float32)   # logits
    z = true_ref[...].astype(jnp.float32)   # targets

    # One exp per element, reused for the stable BCE and for sigmoid.
    e = jnp.exp(-jnp.abs(x))
    # BCEWithLogitsLoss (reduction='none'), numerically stable:
    #   max(x, 0) - x*z + log(1 + exp(-|x|))
    bce = jnp.maximum(x, 0.0) - x * z + jnp.log1p(e)

    # sigmoid(x) derived from the already-computed exp.
    num = jnp.where(x >= 0.0, 1.0, e)
    den = 1.0 + e
    if approx_reciprocal:
        p = num * pl.reciprocal(den, approx=True)   # EUP slot, ~1e-3 rel err
    else:
        p = num / den

    p_t = z * p + (1.0 - z) * (1.0 - p)
    alpha_factor = z * alpha + (1.0 - z) * (1.0 - alpha)
    t = 1.0 - p_t
    if gamma == 1.5:
        modulating = t * jnp.sqrt(t)                # t**1.5 without pow
    elif gamma == 2.0:
        modulating = t * t
    else:
        modulating = t ** gamma
    loss = bce * alpha_factor * modulating

    # Vector accumulate: fold rows into 8 sublanes, keep lanes dense.  The
    # single cross-lane collapse is deferred to the wrapper-side jnp.sum.
    out_ref[...] += loss.reshape(-1, 8, LANES).sum(axis=0)   # (8, 128)


def _focal_loss_elementwise(pred, true, gamma, alpha):
    """Plain-JAX per-element focal loss (ragged tail + reference)."""
    x = pred.astype(jnp.float32)
    z = true.astype(jnp.float32)
    bce = jnp.maximum(x, 0.0) - x * z + jnp.log1p(jnp.exp(-jnp.abs(x)))
    p = jax.nn.sigmoid(x)
    p_t = z * p + (1.0 - z) * (1.0 - p)
    alpha_factor = z * alpha + (1.0 - z) * (1.0 - alpha)
    modulating = (1.0 - p_t) ** gamma
    return bce * alpha_factor * modulating


def focal_loss(pred, true, *, gamma=GAMMA, alpha=ALPHA, reduction="mean",
               tile_rows=2048, num_shards=1, approx_reciprocal=False):
    """FocalLoss.forward with loss_fcn = BCEWithLogitsLoss.

    pred / true: same shape (e.g. NCHW logits / targets), any float dtype.
    reduction: 'mean' (BCEWithLogitsLoss default) or 'sum'; 'none' falls back
    to plain JAX.
    num_shards: set 2 on v7x (2 TensorCores, CORE_PARALLEL); leave 1 on
    v5e/v6e where the shard axis would just be a serial loop.
    """
    assert pred.shape == true.shape
    if reduction == "none":
        # TODO(synk): elementwise ('none') output not ported to Pallas.
        return _focal_loss_elementwise(pred, true, gamma, alpha)

    n = pred.size
    pred_flat = jnp.ravel(pred)
    true_flat = jnp.ravel(true)

    rows_full = n // LANES   # complete 128-lane rows in the input
    # Tile sizing: big for HBM streaming, capped for small inputs, mult of 8.
    tr = max(8, min(_round_down(tile_rows, 8), _round_down(max(rows_full, 8), 8)))
    shard_rows = tr * num_shards        # rows consumed per grid "super step"

    main_rows = _round_down(rows_full, shard_rows)
    tail_sum = jnp.float32(0.0)
    if main_rows == 0:
        # Input smaller than one tile: pad (cheap, < one tile) with a
        # zero-loss filler (logit=-100, target=0 -> exactly 0 contribution),
        # so the kernel never needs a mask.
        pad = shard_rows * LANES - n
        pred_main = jnp.pad(pred_flat, (0, pad), constant_values=-100.0)
        true_main = jnp.pad(true_flat, (0, pad), constant_values=0.0)
        main_rows = shard_rows
    else:
        main_elems = main_rows * LANES
        pred_main = lax.slice(pred_flat, (0,), (main_elems,))
        true_main = lax.slice(true_flat, (0,), (main_elems,))
        if main_elems < n:
            # Ragged tail (< one super-tile): tiny, plain JAX.  Avoids the
            # full-array jnp.pad read+write copy of both inputs.
            tail_sum = jnp.sum(_focal_loss_elementwise(
                lax.slice(pred_flat, (main_elems,), (n,)),
                lax.slice(true_flat, (main_elems,), (n,)),
                gamma, alpha))

    tiles_per_shard = main_rows // shard_rows
    pred2 = pred_main.reshape(main_rows, LANES)
    true2 = true_main.reshape(main_rows, LANES)

    kernel = functools.partial(
        _focal_loss_kernel, gamma=gamma, alpha=alpha,
        approx_reciprocal=approx_reciprocal)

    if num_shards > 1:
        # v7x: genuinely shard the tile loop across the 2 TensorCores
        # (plain "parallel" semantics measurably change nothing).
        dim_sem = (pltpu.CORE_PARALLEL, pltpu.ARBITRARY)
    else:
        dim_sem = (pltpu.ARBITRARY, pltpu.ARBITRARY)

    partials = pl.pallas_call(
        kernel,
        out_shape=jax.ShapeDtypeStruct((num_shards * 8, LANES), jnp.float32),
        grid_spec=pltpu.PrefetchScalarGridSpec(
            num_scalar_prefetch=0,
            grid=(num_shards, tiles_per_shard),
            in_specs=[
                pl.BlockSpec((tr, LANES), lambda s, i: (s * tiles_per_shard + i, 0)),
                pl.BlockSpec((tr, LANES), lambda s, i: (s * tiles_per_shard + i, 0)),
            ],
            out_specs=pl.BlockSpec((8, LANES), lambda s, i: (s, 0)),
        ),
        compiler_params=pltpu.CompilerParams(dimension_semantics=dim_sem),
    )(pred2, true2)

    total = jnp.sum(partials) + tail_sum
    if reduction == "sum":
        return total
    return total / n   # 'mean' (inherited from BCEWithLogitsLoss default)


def _focal_loss_ref(pred, true, gamma=GAMMA, alpha=ALPHA):
    return jnp.mean(_focal_loss_elementwise(pred, true, gamma, alpha))


if __name__ == "__main__":
    key = jax.random.PRNGKey(0)
    k1, k2, k3, k4 = jax.random.split(key, 4)

    # NCHW logits / targets: batch=2, channels=4, spatial=16x16 (lane-aligned)
    pred = jax.random.normal(k1, (2, 4, 16, 16), dtype=jnp.float32) * 2.0
    true = jax.random.uniform(k2, (2, 4, 16, 16), dtype=jnp.float32)

    out = focal_loss(pred, true)
    out = jax.block_until_ready(out)
    ref = _focal_loss_ref(pred, true)
    assert jnp.allclose(out, ref, rtol=1e-5, atol=1e-6), (out, ref)

    # Misaligned small shape: exercises the tiny-input zero-loss-filler path.
    pred_s = jax.random.normal(k3, (3, 5, 7, 9), dtype=jnp.float32) * 2.0
    true_s = jax.random.uniform(k4, (3, 5, 7, 9), dtype=jnp.float32)
    out_s = jax.block_until_ready(focal_loss(pred_s, true_s))
    ref_s = _focal_loss_ref(pred_s, true_s)
    assert jnp.allclose(out_s, ref_s, rtol=1e-5, atol=1e-6), (out_s, ref_s)

    print("KERNEL_OK")
</pallas_src>

<mosaic_0001>
module attributes {stable_mosaic.version = 11 : i64} {
  func.func @_focal_loss_kernel(%arg0: i32, %arg1: i32, %arg2: memref<16x128xf32, #tpu.memory_space<vmem>>, %arg3: memref<16x128xf32, #tpu.memory_space<vmem>>, %arg4: memref<8x128xf32, #tpu.memory_space<vmem>>) attributes {dimension_semantics = [#tpu.dimension_semantics<arbitrary>, #tpu.dimension_semantics<arbitrary>], iteration_bounds = array<i64: 1, 1>, scalar_prefetch = 0 : i64, scratch_operands = 0 : i64, tpu.core_type = #tpu.core_type<tc>, window_params = [{transform_indices = @transform_0, window_bounds = array<i64: 16, 128>}, {transform_indices = @transform_1, window_bounds = array<i64: 16, 128>}, {transform_indices = @transform_2, window_bounds = array<i64: 8, 128>}]} {
    %c0_i32 = arith.constant 0 : i32
    %0 = arith.cmpi eq, %arg1, %c0_i32 : i32
    %1 = arith.extui %0 : i1 to i32
    %c0_i32_0 = arith.constant 0 : i32
    %2 = arith.cmpi ne, %1, %c0_i32_0 : i32
    scf.if %2 {
      %cst_19 = arith.constant 0.000000e+00 : f32
      %47 = vector.broadcast %cst_19 : f32 to vector<8x128xf32>
      %c0_20 = arith.constant 0 : index
      %c0_21 = arith.constant 0 : index
      %48 = vector.load %arg4[%c0_20, %c0_21] : memref<8x128xf32, #tpu.memory_space<vmem>>, vector<8x128xf32>
      tpu.vector_store %arg4[%c0_20, %c0_21], %47 {strides = array<i32>} : memref<8x128xf32, #tpu.memory_space<vmem>>, vector<8x128xf32>,
    } else {
    }
    %c0 = arith.constant 0 : index
    %c0_1 = arith.constant 0 : index
    %3 = vector.load %arg2[%c0, %c0_1] : memref<16x128xf32, #tpu.memory_space<vmem>>, vector<16x128xf32>
    %c0_2 = arith.constant 0 : index
    %c0_3 = arith.constant 0 : index
    %4 = vector.load %arg3[%c0_2, %c0_3] : memref<16x128xf32, #tpu.memory_space<vmem>>, vector<16x128xf32>
    %5 = math.absf %3 : vector<16x128xf32>
    %cst = arith.constant 0.000000e+00 : f32
    %6 = vector.broadcast %cst : f32 to vector<16x128xf32>
    %7 = arith.subf %6, %5 : vector<16x128xf32>
    %8 = math.exp %7 : vector<16x128xf32>
    %cst_4 = arith.constant 0.000000e+00 : f32
    %9 = vector.broadcast %cst_4 : f32 to vector<16x128xf32>
    %10 = arith.maximumf %3, %9 : vector<16x128xf32>
    %11 = arith.mulf %3, %4 : vector<16x128xf32>
    %12 = arith.subf %10, %11 : vector<16x128xf32>
    %13 = math.log1p %8 : vector<16x128xf32>
    %14 = arith.addf %12, %13 : vector<16x128xf32>
    %cst_5 = arith.constant 0.000000e+00 : f32
    %15 = vector.broadcast %cst_5 : f32 to vector<16x128xf32>
    %16 = arith.cmpf oge, %3, %15 : vector<16x128xf32>
    %cst_6 = arith.constant 1.000000e+00 : f32
    %17 = vector.broadcast %cst_6 : f32 to vector<16x128xf32>
    %18 = arith.select %16, %17, %8 : vector<16x128xi1>, vector<16x128xf32>
    %cst_7 = arith.constant 1.000000e+00 : f32
    %19 = vector.broadcast %cst_7 : f32 to vector<16x128xf32>
    %20 = arith.addf %19, %8 : vector<16x128xf32>
    %21 = arith.divf %18, %20 : vector<16x128xf32>
    %22 = arith.mulf %4, %21 : vector<16x128xf32>
    %cst_8 = arith.constant 1.000000e+00 : f32
    %23 = vector.broadcast %cst_8 : f32 to vector<16x128xf32>
    %24 = arith.subf %23, %4 : vector<16x128xf32>
    %cst_9 = arith.constant 1.000000e+00 : f32
    %25 = vector.broadcast %cst_9 : f32 to vector<16x128xf32>
    %26 = arith.subf %25, %21 : vector<16x128xf32>
    %27 = arith.mulf %24, %26 : vector<16x128xf32>
    %28 = arith.addf %22, %27 : vector<16x128xf32>
    %cst_10 = arith.constant 2.500000e-01 : f32
    %29 = vector.broadcast %cst_10 : f32 to vector<16x128xf32>
    %30 = arith.mulf %4, %29 : vector<16x128xf32>
    %cst_11 = arith.constant 1.000000e+00 : f32
    %31 = vector.broadcast %cst_11 : f32 to vector<16x128xf32>
    %32 = arith.subf %31, %4 : vector<16x128xf32>
    %cst_12 = arith.constant 7.500000e-01 : f32
    %33 = vector.broadcast %cst_12 : f32 to vector<16x128xf32>
    %34 = arith.mulf %32, %33 : vector<16x128xf32>
    %35 = arith.addf %30, %34 : vector<16x128xf32>
    %cst_13 = arith.constant 1.000000e+00 : f32
    %36 = vector.broadcast %cst_13 : f32 to vector<16x128xf32>
    %37 = arith.subf %36, %28 : vector<16x128xf32>
    %38 = math.sqrt %37 : vector<16x128xf32>
    %39 = arith.mulf %37, %38 : vector<16x128xf32>
    %40 = arith.mulf %14, %35 : vector<16x128xf32>
    %41 = arith.mulf %40, %39 : vector<16x128xf32>
    %c0_14 = arith.constant 0 : index
    %c0_15 = arith.constant 0 : index
    %42 = vector.load %arg4[%c0_14, %c0_15] : memref<8x128xf32, #tpu.memory_space<vmem>>, vector<8x128xf32>
    %43 = vector.shape_cast %41 : vector<16x128xf32> to vector<2x8x128xf32>
    %cst_16 = arith.constant dense<0.000000e+00> : vector<8x128xf32>
    %44 = vector.multi_reduction <add>, %43, %cst_16 [0] : vector<2x8x128xf32> to vector<8x128xf32>
    %45 = arith.addf %42, %44 : vector<8x128xf32>
    %c0_17 = arith.constant 0 : index
    %c0_18 = arith.constant 0 : index
    %46 = vector.load %arg4[%c0_17, %c0_18] : memref<8x128xf32, #tpu.memory_space<vmem>>, vector<8x128xf32>
    tpu.vector_store %arg4[%c0_17, %c0_18], %45 {strides = array<i32>} : memref<8x128xf32, #tpu.memory_space<vmem>>, vector<8x128xf32>,
    return
  }
  func.func @transform_0(%arg0: i32, %arg1: i32) -> (i32, i32) {
    %c1_i32 = arith.constant 1 : i32
    %0 = arith.muli %arg0, %c1_i32 : i32
    %1 = arith.addi %0, %arg1 : i32
    %c0_i32 = arith.constant 0 : i32
    %c0_i32_0 = arith.constant 0 : i32
    return %1, %c0_i32 : i32, i32
  }
  func.func @transform_1(%arg0: i32, %arg1: i32) -> (i32, i32) {
    %c1_i32 = arith.constant 1 : i32
    %0 = arith.muli %arg0, %c1_i32 : i32
    %1 = arith.addi %0, %arg1 : i32
    %c0_i32 = arith.constant 0 : i32
    %c0_i32_0 = arith.constant 0 : i32
    return %1, %c0_i32 : i32, i32
  }
  func.func @transform_2(%arg0: i32, %arg1: i32) -> (i32, i32) {
    %c0_i32 = arith.constant 0 : i32
    %c0_i32_0 = arith.constant 0 : i32
    return %arg0, %c0_i32 : i32, i32
  }
}

</mosaic_0001>

<llo_original>
// kernel: tpu_custom_call.1
$region0: #{tpu_custom_call.1}
  #allocation0 [shape = 'u32[]', space=smem, size = 0x4, offset = 0x4, fixed_abs, tag = 'smem constant byte address 0x4 - core index']
  #allocation1 [shape = 'u32[144,128]{1,0:T(1,128)}', space=vmem, size = 0x12000, scoped, tag = 'internal scratch']
  %s0 = inlined_call_operand.hbm [shape: f32[16,128], index: 0, kind: input, shape index: {}]
  %s1 = inlined_call_operand.hbm [shape: f32[16,128], index: 1, kind: input, shape index: {}]
  %s2 = inlined_call_operand.hbm [shape: f32[8,128], index: 2, kind: output, shape index: {}]
  %s3 = sld [smem:[#allocation0]]
  $region30: #{tpu_custom_call.1} parent=0
    _
  %s5 = ssub.s32 1, %s3
  %s6 = scalar_select 0, %s5, %s3
  $region1: #{tpu_custom_call.1} parent=0
    #allocation2 [shape = 'u8[8192]{0}', space=vmem, size = 0x2000, scoped, tag = 'input window, operand 0, single buffered']
    #allocation3 [shape = 's32[1]{0}', space=sflag, size = 0x4, scoped, tag = 'scoped memory for tpu_custom_call.1']
    #allocation4 [shape = 's32[1]{0}', space=sflag, size = 0x4, scoped, tag = 'scoped memory for tpu_custom_call.1']
    #allocation5 [shape = 'u8[8192]{0}', space=vmem, size = 0x2000, scoped, tag = 'input window, operand 1, single buffered']
    #allocation6 [shape = 's32[1]{0}', space=sflag, size = 0x4, scoped, tag = 'scoped memory for tpu_custom_call.1']
    #allocation7 [shape = 'u8[4096]{0}', space=vmem, size = 0x1000, scoped, tag = 'output window, operand 0, single buffered']
    %7 = vsyncpa [#allocation3], 0
    %8 = vsyncpa [#allocation6], 0
    %9 = vsyncpa [#allocation4], 0
    // Predicated region
    $region2: #{tpu_custom_call.1} parent=1 // pred_check
      _
    $region3: #{tpu_custom_call.1} parent=1 // pred_check_branch
      %11 = sbr.rel (0) target = $region5
    $region4: #{tpu_custom_call.1} parent=1 // pred_region
      %s12 = sadd.s32 0, 0
      %s13 = smul.u32 2, %s12
      %s15 = ssub.s32 256, 256
      %16 = vsyncadd [#allocation3], %s15
      %s17 = smul.addr %s13, 128
      %s18 = scalar_lea.hbm %s0, %s17
      %s19 = sshll.u32 [#allocation2], 4
      %s20 = int_to_ptr.vmem [resolvable:$true] %s19
      %25 = dma.hbm_to_vmem [thread:$0]  %s18, 256, %s20, [#allocation3], 128, 128, 8
    $region5: #{tpu_custom_call.1} parent=1 // pred_fallthru
      _
    // Predicated region
    $region6: #{tpu_custom_call.1} parent=1 // pred_check
      _
    $region7: #{tpu_custom_call.1} parent=1 // pred_check_branch
      %27 = sbr.rel (0) target = $region9
    $region8: #{tpu_custom_call.1} parent=1 // pred_region
      %s28 = sadd.s32 0, 0
      %s29 = smul.u32 2, %s28
      %s31 = ssub.s32 256, 256
      %32 = vsyncadd [#allocation6], %s31
      %s33 = smul.addr %s29, 128
      %s34 = scalar_lea.hbm %s1, %s33
      %s35 = sshll.u32 [#allocation5], 4
      %s36 = int_to_ptr.vmem [resolvable:$true] %s35
      %41 = dma.hbm_to_vmem [thread:$0]  %s34, 256, %s36, [#allocation6], 128, 128, 8
    $region9: #{tpu_custom_call.1} parent=1 // pred_fallthru
      _
    // Predicated region
    $region10: #{tpu_custom_call.1} parent=1 // pred_check
      _
    $region11: #{tpu_custom_call.1} parent=1 // pred_check_branch
      %43 = sbr.rel (0) target = $region13
    $region12: #{tpu_custom_call.1} parent=1 // pred_region
      %44 = dma.done [#allocation3], 256
    $region13: #{tpu_custom_call.1} parent=1 // pred_fallthru
      _
    // Predicated region
    $region14: #{tpu_custom_call.1} parent=1 // pred_check
      _
    $region15: #{tpu_custom_call.1} parent=1 // pred_check_branch
      %46 = sbr.rel (0) target = $region17
    $region16: #{tpu_custom_call.1} parent=1 // pred_region
      %47 = dma.done [#allocation6], 256
    $region17: #{tpu_custom_call.1} parent=1 // pred_fallthru
      _
    %s48 = sadd.s32 0, 0
    %s49 = smul.u32 2, %s48
    %s50 = sadd.s32 0, 0
    %s51 = smul.u32 2, %s50
    %p52 = scmp.eq.s32.totalorder 0, 0
    // Predicated region
    $region18: #{tpu_custom_call.1} parent=1 // pred_check
      %p53 = pneg %p52
    $region19: #{tpu_custom_call.1} parent=1 // pred_check_branch
      %55 = sbr.rel (%p53) target = $region21
    $region20: #{tpu_custom_call.1} parent=1 // pred_region
      %56 = vst [vmem:[#allocation7] sm:$0xff] 0.0
    $region21: #{tpu_custom_call.1} parent=1 // pred_fallthru
      _
    %v57 = vld [vmem:[#allocation2] sm:$0xff]
    %v58 = vld [vmem:[#allocation2 + $0x8] sm:$0xff]
    %v59 = vld [vmem:[#allocation5] sm:$0xff]
    %v60 = vld [vmem:[#allocation5 + $0x8] sm:$0xff]
    %v61 = vand.u32 2147483647, %v57
    %v62 = vand.u32 2147483647, %v58
    %v63 = vsub.f32 0.0, %v61
    %v64 = vsub.f32 0.0, %v62
    %v65 = vmul.f32 %v63, 1.442695
    %v66 = vpow.pop %v65
    %v67 = vmul.f32 %v64, 1.442695
    %v68 = vpow.pop %v67
    %v69 = vmax.f32 %v57, 0.0
    %v70 = vmax.f32 %v58, 0.0
    %v71 = vmul.f32 %v57, %v59
    %v72 = vmul.f32 %v58, %v60
    %v73 = vsub.f32 %v69, %v71
    %v74 = vsub.f32 %v70, %v72
    %v75 = vadd.f32 %v66, 1.0
    %v76 = vlog2.pop %v75
    %v77 = vmul.f32 %v76, 0.6931472
    %v78 = vmul.f32 -0.5, %v66
    %v79 = vadd.f32 %v78, 1.0
    %v80 = vmul.f32 %v79, %v66
    %v81 = vand.u32 2147483647, %v66
    %vm82 = vcmp.lt.f32.partialorder %v81, 0.0004427343
    %v83 = vsel %vm82, %v80, %v77
    %v84 = vadd.f32 %v68, 1.0
    %v85 = vlog2.pop %v84
    %v86 = vmul.f32 %v85, 0.6931472
    %v87 = vmul.f32 -0.5, %v68
    %v88 = vadd.f32 %v87, 1.0
    %v89 = vmul.f32 %v88, %v68
    %v90 = vand.u32 2147483647, %v68
    %vm91 = vcmp.lt.f32.partialorder %v90, 0.0004427343
    %v92 = vsel %vm91, %v89, %v86
    %v93 = vadd.f32 %v73, %v83
    %v94 = vadd.f32 %v74, %v92
    %vm95 = vcmp.ge.f32.partialorder %v57, 0.0
    %vm96 = vcmp.ge.f32.partialorder %v58, 0.0
    %v97 = vsel %vm95, 1.0, %v66
    %v98 = vsel %vm96, 1.0, %v68
    %v99 = vadd.f32 %v66, 1.0
    %v100 = vadd.f32 %v68, 1.0
    %v101 = vrcp.pop %v99
    %v102 = vmul.f32 %v97, %v101
    %v103 = vrcp.pop %v100
    %v104 = vmul.f32 %v98, %v103
    %v105 = vmul.f32 %v59, %v102
    %v106 = vmul.f32 %v60, %v104
    %v107 = vsub.f32 1.0, %v59
    %v108 = vsub.f32 1.0, %v60
    %v109 = vsub.f32 1.0, %v102
    %v110 = vsub.f32 1.0, %v104
    %v111 = vmul.f32 %v107, %v109
    %v112 = vmul.f32 %v108, %v110
    %v113 = vadd.f32 %v105, %v111
    %v114 = vadd.f32 %v106, %v112
    %v115 = vmul.f32 %v59, 0.25
    %v116 = vmul.f32 %v60, 0.25
    %v117 = vmul.f32 %v107, 0.75
    %v118 = vmul.f32 %v108, 0.75
    %v119 = vadd.f32 %v115, %v117
    %v120 = vadd.f32 %v116, %v118
    %v121 = vsub.f32 1.0, %v113
    %v122 = vsub.f32 1.0, %v114
    %v123 = vrsqrt.pop %v121
    %v124 = vmul.f32 %v121, %v123
    %vm125 = vcmp.eq.f32.partialorder %v121, inf
    %v126 = vsel %vm125, %v121, %v124
    %vm127 = vcmp.eq.f32.partialorder %v121, 0.0
    %v128 = vand.u32 %v121, 2147483648
    %v129 = vsel %vm127, %v128, %v126
    %v130 = vrsqrt.pop %v122
    %v131 = vmul.f32 %v122, %v130
    %vm132 = vcmp.eq.f32.partialorder %v122, inf
    %v133 = vsel %vm132, %v122, %v131
    %vm134 = vcmp.eq.f32.partialorder %v122, 0.0
    %v135 = vand.u32 %v122, 2147483648
    %v136 = vsel %vm134, %v135, %v133
    %v137 = vmul.f32 %v121, %v129
    %v138 = vmul.f32 %v122, %v136
    %v139 = vmul.f32 %v93, %v119
    %v140 = vmul.f32 %v94, %v120
    %v141 = vmul.f32 %v139, %v137
    %v142 = vmul.f32 %v140, %v138
    %v143 = vld [vmem:[#allocation7] sm:$0xff]
    %v144 = vadd.f32 %v141, %v142
    %v145 = vadd.f32 %v143, %v144
    %146 = vst [vmem:[#allocation7] sm:$0xff] %v145
    // Predicated region
    $region22: #{tpu_custom_call.1} parent=1 // pred_check
      _
    $region23: #{tpu_custom_call.1} parent=1 // pred_check_branch
      %148 = sbr.rel (0) target = $region25
    $region24: #{tpu_custom_call.1} parent=1 // pred_region
      %s150 = ssub.s32 128, 128
      %151 = vsyncadd [#allocation4], %s150
      %s153 = sshll.u32 [#allocation7], 4
      %s154 = int_to_ptr.vmem [resolvable:$true] %s153
      %156 = dma.vmem_to_hbm [thread:$0]  %s154, 128, %s2, [#allocation4]
    $region25: #{tpu_custom_call.1} parent=1 // pred_fallthru
      _
    // Predicated region
    $region26: #{tpu_custom_call.1} parent=1 // pred_check
      _
    $region27: #{tpu_custom_call.1} parent=1 // pred_check_branch
      %158 = sbr.rel (0) target = $region29
    $region28: #{tpu_custom_call.1} parent=1 // pred_region
      %159 = dma.done [#allocation4], 128
    $region29: #{tpu_custom_call.1} parent=1 // pred_fallthru
      _
    %160 = vsyncpa [#allocation3], 1
    %161 = vsyncpa [#allocation6], 1
    %162 = vsyncpa [#allocation4], 1

</llo_original>
